<compile_context>
chip_gen: v6e
topology: v6e:2x2x1
jax: 0.10.0
libtpu: 0.0.40
codegen_flags: <defaults>
</compile_context>

<pallas_src>
import functools

import jax
import jax.numpy as jnp
import numpy as np
from jax.experimental import pallas as pl
from jax.experimental.pallas import tpu as pltpu


def _round_up(x, m):
    return (x + m - 1) // m * m


def _bn_quant_kernel(x_ref, p_ref, out_ref):
    # x_ref:   (TR, TL) float32 VMEM
    # p_ref:   (TR, 2)  float32 VMEM  -- col 0: weight/scale, col 1: bias/scale + zp
    # out_ref: (TR, TL) int8    VMEM
    w = p_ref[:, 0:1]                                  # (TR, 1) broadcast over lanes
    b = p_ref[:, 1:2]
    y = x_ref[...] * w + b                             # fused per-row affine (VPU)
    out_ref[...] = jnp.clip(jnp.round(y), -128.0, 127.0).astype(jnp.int8)


@functools.partial(jax.jit, static_argnames=("row_tile", "lane_tile"))
def quantized_batchnorm(x_nchw, weight, bias, scale, zero_point,
                        *, row_tile=512, lane_tile=2048):
    """Quantized folded BatchNorm forward.

    Args:
      x_nchw:     float32 (N, C, H, W)
      weight:     float32 (C, 1, 1, 1)  -- gamma / sqrt(var + eps)
      bias:       float32 (C,)          -- -gamma*mean/sqrt(var+eps) + beta
      scale:      float32 (1,)          -- output activation quant scale
      zero_point: int32   (C,)          -- output zero point (per channel)
    Returns:
      int8 (N, C, H, W)
    """
    N, C, H, W = x_nchw.shape
    NC, HW = N * C, H * W

    # ---- fold scale / zero_point into per-channel affine (O(C) wrapper work) ----
    # TODO(synk): if bit-exact parity with round(y/scale)+zp is required, move the
    # divide-by-scale into the kernel (free: kernel is HBM-bound, not VPU-bound).
    inv_scale = 1.0 / scale.reshape(()).astype(jnp.float32)
    w_fold = weight.reshape(C).astype(jnp.float32) * inv_scale               # (C,)
    b_fold = (bias.reshape(C).astype(jnp.float32) * inv_scale
              + zero_point.reshape(C).astype(jnp.float32))                   # (C,)

    # Pack per-row params into one array: row r of x2d is channel r % C.
    params = jnp.stack([w_fold, b_fold], axis=-1)                            # (C, 2)
    params = jnp.tile(params, (N, 1))                                        # (NC, 2)

    # Contiguous reshape (no copy).  No HBM padding / slicing anywhere.
    x2d = x_nchw.reshape(NC, HW).astype(jnp.float32)

    # ---- tile selection (lane-dense where possible, edge tiles masked) ----
    if HW % 128 == 0:
        TL = min(lane_tile, HW)              # lane-dense, unmasked stores
    elif HW >= lane_tile:
        TL = lane_tile                       # multiple of 128; last lane block masked
    else:
        TL = HW                              # small/unaligned HW: full last dim

    TR = NC if NC <= row_tile else row_tile  # full dim, or multiple of 32 when tiled

    nR = -(-NC // TR)
    nL = -(-HW // TL)

    # v7x megacore: make sure the leading parallel axis has >= 2 blocks when the
    # slab is big enough to bother splitting.
    if nR < 2 and nL < 2 and NC >= 64:
        TR = max(32, _round_up(-(-NC // 2), 32))
        nR = -(-NC // TR)

    # Put the axis with more blocks first so megacore sharding always has work.
    if nL > nR:
        grid = (nL, nR)
        x_spec = pl.BlockSpec((TR, TL), lambda j, i: (i, j))
        p_spec = pl.BlockSpec((TR, 2), lambda j, i: (i, 0))
        o_spec = pl.BlockSpec((TR, TL), lambda j, i: (i, j))
    else:
        grid = (nR, nL)
        x_spec = pl.BlockSpec((TR, TL), lambda i, j: (i, j))
        p_spec = pl.BlockSpec((TR, 2), lambda i, j: (i, 0))
        o_spec = pl.BlockSpec((TR, TL), lambda i, j: (i, j))

    # Scoped VMEM: actual double-buffered need (+ headroom), capped for v7x.
    in_bytes = TR * TL * 4
    out_bytes = TR * TL * 1
    param_bytes = TR * 128 * 4                 # (TR, 2) block still lane-padded
    need = 2 * (in_bytes + out_bytes + param_bytes)
    vmem_limit = int(min(max(need + (4 << 20), 8 << 20), 48 << 20))

    out2d = pl.pallas_call(
        _bn_quant_kernel,
        out_shape=jax.ShapeDtypeStruct((NC, HW), jnp.int8),
        grid=grid,
        in_specs=[x_spec, p_spec],
        out_specs=o_spec,
        compiler_params=pltpu.CompilerParams(
            dimension_semantics=("parallel", "parallel"),
            vmem_limit_bytes=vmem_limit,
        ),
    )(x2d, params)

    return out2d.reshape(N, C, H, W)


if __name__ == "__main__":
    # Small NCHW shapes consistent with a BatchNorm2d input.
    N, C, H, W = 2, 4, 16, 16

    key = jax.random.PRNGKey(0)
    kx, kw, kb = jax.random.split(key, 3)

    x = jax.random.normal(kx, (N, C, H, W), dtype=jnp.float32)

    # Deterministic "folded" parameters (shapes mirror the module's buffers).
    weight = (1.0 + 0.1 * jax.random.normal(kw, (C,))).reshape(C, 1, 1, 1)   # (C,1,1,1)
    bias = 0.1 * jax.random.normal(kb, (C,))                                  # (C,)
    scale = jnp.array([0.05], dtype=jnp.float32)                              # (1,)
    zero_point = jnp.zeros((C,), dtype=jnp.int32)                             # (C,)
    # TODO(synk): weight_scale / weight_zero_point / bias_scale / bias_zero_point
    # buffers are conversion metadata only (unused in the folded forward).

    out = quantized_batchnorm(x, weight, bias, scale, zero_point)
    out = jax.block_until_ready(out)

    assert out.dtype == jnp.int8
    assert out.shape == (N, C, H, W)

    # Exact reference using the same folded math as the kernel.
    w_f = (weight.reshape(1, C, 1, 1) / scale[0]).astype(jnp.float32)
    b_f = (bias.reshape(1, C, 1, 1) / scale[0]
           + zero_point.reshape(1, C, 1, 1).astype(jnp.float32))
    q_fold_ref = jnp.clip(jnp.round(x * w_f + b_f), -128.0, 127.0).astype(jnp.int8)
    np.testing.assert_array_equal(np.asarray(out), np.asarray(q_fold_ref))

    # Spec-form reference (divide by scale in-place); ties in round-half-to-even
    # can shift by at most 1 LSB after folding, so allow +/-1.
    y_ref = x * weight.reshape(1, C, 1, 1) + bias.reshape(1, C, 1, 1)
    q_spec_ref = jnp.clip(
        jnp.round(y_ref / scale[0]) + zero_point.reshape(1, C, 1, 1).astype(jnp.float32),
        -128.0, 127.0,
    ).astype(jnp.int8)
    diff = np.abs(np.asarray(out, dtype=np.int32) - np.asarray(q_spec_ref, dtype=np.int32))
    assert diff.max() <= 1, f"max LSB diff {diff.max()}"

    print("KERNEL_OK")
</pallas_src>

<mosaic_0001>
module attributes {stable_mosaic.version = 11 : i64} {
  func.func @_bn_quant_kernel(%arg0: i32, %arg1: i32, %arg2: memref<8x256xf32, #tpu.memory_space<vmem>>, %arg3: memref<8x2xf32, #tpu.memory_space<vmem>>, %arg4: memref<8x256xi8, #tpu.memory_space<vmem>>) attributes {dimension_semantics = [#tpu.dimension_semantics<parallel>, #tpu.dimension_semantics<parallel>], iteration_bounds = array<i64: 1, 1>, scalar_prefetch = 0 : i64, scratch_operands = 0 : i64, tpu.core_type = #tpu.core_type<tc>, window_params = [{transform_indices = @transform_0, window_bounds = array<i64: 8, 256>}, {transform_indices = @transform_1, window_bounds = array<i64: 8, 2>}, {transform_indices = @transform_2, window_bounds = array<i64: 8, 256>}]} {
    %c0 = arith.constant 0 : index
    %c0_0 = arith.constant 0 : index
    %0 = vector.load %arg3[%c0, %c0_0] : memref<8x2xf32, #tpu.memory_space<vmem>>, vector<8x1xf32>
    %c0_1 = arith.constant 0 : index
    %c1 = arith.constant 1 : index
    %1 = vector.load %arg3[%c0_1, %c1] : memref<8x2xf32, #tpu.memory_space<vmem>>, vector<8x1xf32>
    %c0_2 = arith.constant 0 : index
    %c0_3 = arith.constant 0 : index
    %2 = vector.load %arg2[%c0_2, %c0_3] : memref<8x256xf32, #tpu.memory_space<vmem>>, vector<8x256xf32>
    %3 = vector.broadcast %0 : vector<8x1xf32> to vector<8x256xf32>
    %4 = arith.mulf %2, %3 : vector<8x256xf32>
    %5 = vector.broadcast %1 : vector<8x1xf32> to vector<8x256xf32>
    %6 = arith.addf %4, %5 : vector<8x256xf32>
    %7 = math.roundeven %6 : vector<8x256xf32>
    %cst = arith.constant -1.280000e+02 : f32
    %cst_4 = arith.constant 1.270000e+02 : f32
    %8 = vector.broadcast %cst : f32 to vector<8x256xf32>
    %9 = arith.maximumf %8, %7 : vector<8x256xf32>
    %10 = vector.broadcast %cst_4 : f32 to vector<8x256xf32>
    %11 = arith.minimumf %10, %9 : vector<8x256xf32>
    %12 = arith.fptosi %11 : vector<8x256xf32> to vector<8x256xi8>
    %c0_5 = arith.constant 0 : index
    %c0_6 = arith.constant 0 : index
    %13 = vector.load %arg4[%c0_5, %c0_6] : memref<8x256xi8, #tpu.memory_space<vmem>>, vector<8x256xi8>
    tpu.vector_store %arg4[%c0_5, %c0_6], %12 {strides = array<i32>} : memref<8x256xi8, #tpu.memory_space<vmem>>, vector<8x256xi8>,
    return
  }
  func.func @transform_0(%arg0: i32, %arg1: i32) -> (i32, i32) {
    %c0_i32 = arith.constant 0 : i32
    return %arg0, %arg1 : i32, i32
  }
  func.func @transform_1(%arg0: i32, %arg1: i32) -> (i32, i32) {
    %c0_i32 = arith.constant 0 : i32
    %c0_i32_0 = arith.constant 0 : i32
    return %arg0, %c0_i32 : i32, i32
  }
  func.func @transform_2(%arg0: i32, %arg1: i32) -> (i32, i32) {
    %c0_i32 = arith.constant 0 : i32
    return %arg0, %arg1 : i32, i32
  }
}

</mosaic_0001>

<llo_original>
// kernel: quantized_batchnorm.1
$region0: #{quantized_batchnorm.1}
  #allocation0 [shape = 'u32[]', space=smem, size = 0x4, offset = 0x4, fixed_abs, tag = 'smem constant byte address 0x4 - core index']
  #allocation1 [shape = 'u32[144,128]{1,0:T(1,128)}', space=vmem, size = 0x12000, scoped, tag = 'internal scratch']
  %s0 = inlined_call_operand.vmem [shape: f32[8,256], index: 0, kind: input, shape index: {}]
  %s1 = inlined_call_operand.vmem [shape: f32[8,2], index: 1, kind: input, shape index: {}]
  %s2 = inlined_call_operand.vmem [shape: s8[8,256], index: 2, kind: output, shape index: {}]
  %s3 = sld [smem:[#allocation0]]
  $region18: #{quantized_batchnorm.1} parent=0
    _
  %s5 = ssub.s32 1, %s3
  %s6 = scalar_select 0, %s5, %s3
  // Predicated region
  $region2: #{quantized_batchnorm.1} parent=0 // pred_check
    _
  $region3: #{quantized_batchnorm.1} parent=0 // pred_check_branch
    %8 = sbr.rel (0) target = $region5
  $region4: #{quantized_batchnorm.1} parent=0 // pred_region
    _
  $region5: #{quantized_batchnorm.1} parent=0 // pred_fallthru
    _
  // Predicated region
  $region6: #{quantized_batchnorm.1} parent=0 // pred_check
    _
  $region7: #{quantized_batchnorm.1} parent=0 // pred_check_branch
    %10 = sbr.rel (0) target = $region9
  $region8: #{quantized_batchnorm.1} parent=0 // pred_region
    _
  $region9: #{quantized_batchnorm.1} parent=0 // pred_fallthru
    _
  %v11 = vld [vmem:[%s1] sm:$0xff]
  %v12 = vld [vmem:[%s0] sm:$0xff]
  %v13 = vld [vmem:[%s0 + $0x8] sm:$0xff]
  %15 = vset.pattern.permute.xlu0 0
  %16 = vperm.xlu0 %15, %v11
  %v17 = vpop.permute.xlu0 %16
  %v19 = vmul.f32 %v12, %v17
  %v20 = vmul.f32 %v13, %v17
  %21 = vset.pattern.permute.xlu0 1
  %22 = vperm.xlu0 %21, %v11
  %v23 = vpop.permute.xlu0 %22
  %v25 = vadd.f32 %v19, %v23
  %v26 = vadd.f32 %v20, %v23
  %v27 = vround.ne.pseudo %v25
  %v28 = vround.ne.pseudo %v26
  %v29 = vmax.f32 %v27, -128.0
  %v30 = vmax.f32 %v28, -128.0
  %v31 = vmin.f32 %v29, 127.0
  %v32 = vmin.f32 %v30, 127.0
  %v33 = vmax.f32 %v31, -128.0
  %v34 = vmax.f32 %v32, -128.0
  %v35 = vmin.f32 %v33, 127.0
  %v36 = vmin.f32 %v34, 127.0
  %v37 = vcvt.f32.s32.to.zero.pseudo %v35
  %v38 = vcvt.f32.s32.to.zero.pseudo %v36
  %v39 = vpack.c.b16 %v38, %v37
  %v40 = vpack.c.b8 %v39, %v39
  %41 = vst [vmem:[%s2] sm:$0xf] %v40
  // Predicated region
  $region10: #{quantized_batchnorm.1} parent=0 // pred_check
    _
  $region11: #{quantized_batchnorm.1} parent=0 // pred_check_branch
    %43 = sbr.rel (0) target = $region13
  $region12: #{quantized_batchnorm.1} parent=0 // pred_region
    _
  $region13: #{quantized_batchnorm.1} parent=0 // pred_fallthru
    _
  // Predicated region
  $region14: #{quantized_batchnorm.1} parent=0 // pred_check
    _
  $region15: #{quantized_batchnorm.1} parent=0 // pred_check_branch
    %45 = sbr.rel (0) target = $region17
  $region16: #{quantized_batchnorm.1} parent=0 // pred_region
    _
  $region17: #{quantized_batchnorm.1} parent=0 // pred_fallthru
    _

</llo_original>
